<compile_context>
chip_gen: v6e
topology: v6e:2x2x1
jax: 0.10.0
libtpu: 0.0.40
codegen_flags: <defaults>
</compile_context>

<pallas_src>
import numpy as np

import jax
import jax.numpy as jnp
from jax.experimental import pallas as pl
from jax.experimental.pallas import tpu as pltpu

MAX_LENGTH = 128


def _round_up(x: int, m: int) -> int:
    return ((x + m - 1) // m) * m


def _gcn2_kernel(a_ref, x_ref, w1_ref, w2_ref, o_ref):
    """Fused 2-layer GCN forward.  All refs are full-extent VMEM tiles."""
    a = a_ref[...]        # (N, N)     bf16
    x = x_ref[...]        # (N, F)     bf16
    w1 = w1_ref[...]      # (F, Hd)    bf16
    w2 = w2_ref[...]      # (Hd, C)    bf16

    # ---- Layer 1:  H = relu(A_hat @ (X @ W1)) ----
    xw1 = jnp.dot(x, w1, preferred_element_type=jnp.float32)            # (N, Hd) f32
    h = jnp.dot(a, xw1.astype(jnp.bfloat16),
                preferred_element_type=jnp.float32)                      # (N, Hd) f32
    h = jnp.maximum(h, 0.0)                                              # ReLU in f32

    # ---- Layer 2:  H2 = relu(A_hat @ (H @ W2)) ----
    hw2 = jnp.dot(h.astype(jnp.bfloat16), w2,
                  preferred_element_type=jnp.float32)                    # (N, C) f32
    h2 = jnp.dot(a, hw2.astype(jnp.bfloat16),
                 preferred_element_type=jnp.float32)                     # (N, C) f32
    h2 = jnp.maximum(h2, 0.0)

    o_ref[...] = h2.astype(o_ref.dtype)


@jax.jit
def gcn2_forward(a_hat, x, w1, w2):
    """Net.forward: relu(A @ relu(A @ X @ W1) @ W2), fused in one kernel."""
    n = a_hat.shape[0]
    nfeat, nhid = w1.shape
    nout = w2.shape[1]

    f_p = _round_up(nfeat, 128)
    h_p = _round_up(nhid, 128)
    c_p = _round_up(nout, 128)

    # bf16 operands (f32 accumulation happens inside the kernel on the MXU).
    a_b = a_hat.astype(jnp.bfloat16)
    x_b = jnp.pad(x, ((0, 0), (0, f_p - nfeat))).astype(jnp.bfloat16)
    w1_b = jnp.pad(w1, ((0, f_p - nfeat), (0, h_p - nhid))).astype(jnp.bfloat16)
    w2_b = jnp.pad(w2, ((0, h_p - nhid), (0, c_p - nout))).astype(jnp.bfloat16)

    out = pl.pallas_call(
        _gcn2_kernel,
        out_shape=jax.ShapeDtypeStruct((n, c_p), jnp.float32),
        grid=(1,),  # single grid step: whole problem resident in VMEM
        in_specs=[
            pl.BlockSpec((n, n), lambda i: (0, 0)),      # A_hat (stationary)
            pl.BlockSpec((n, f_p), lambda i: (0, 0)),    # X
            pl.BlockSpec((f_p, h_p), lambda i: (0, 0)),  # W1 (stationary)
            pl.BlockSpec((h_p, c_p), lambda i: (0, 0)),  # W2 (stationary)
        ],
        out_specs=pl.BlockSpec((n, c_p), lambda i: (0, 0)),
        compiler_params=pltpu.CompilerParams(
            dimension_semantics=("arbitrary",)),
    )(a_b, x_b, w1_b, w2_b)

    return out[:, :nout]


def _build_a_hat(head: np.ndarray) -> np.ndarray:
    """Mirror GCNConv.__init__: tree adjacency -> D^-1/2 A D^-1/2 (single graph)."""
    adj = np.zeros((MAX_LENGTH, MAX_LENGTH), dtype=np.float32)
    for i in range(MAX_LENGTH):
        if head[i] == -1:
            break
        adj[i, i] = 1.0
        adj[head[i], i] = 1.0
    deg = adj.sum(axis=1)
    d_inv_sqrt = np.diag(1.0 / np.sqrt(deg))
    return (d_inv_sqrt @ adj @ d_inv_sqrt).astype(np.float32)


if __name__ == "__main__":
    nfeat, nhid, nout = 32, 16, 8

    # Deterministic dependency "tree": node i hangs off node i-1 (node 0 -> self).
    head = np.maximum(np.arange(MAX_LENGTH) - 1, 0)
    a_hat = jnp.asarray(_build_a_hat(head))

    key = jax.random.PRNGKey(0)
    kx, k1, k2 = jax.random.split(key, 3)
    x = jax.random.normal(kx, (MAX_LENGTH, nfeat), dtype=jnp.float32)
    w1 = jax.random.uniform(k1, (nfeat, nhid), dtype=jnp.float32)  # torch.rand
    w2 = jax.random.uniform(k2, (nhid, nout), dtype=jnp.float32)   # torch.rand

    out = jax.block_until_ready(gcn2_forward(a_hat, x, w1, w2))

    # Pure-JAX reference with the same bf16-operand / f32-accumulate scheme.
    def ref(a, x, w1, w2):
        ab = a.astype(jnp.bfloat16)
        xw1 = jnp.dot(x.astype(jnp.bfloat16), w1.astype(jnp.bfloat16),
                      preferred_element_type=jnp.float32)
        h = jnp.maximum(jnp.dot(ab, xw1.astype(jnp.bfloat16),
                                preferred_element_type=jnp.float32), 0.0)
        hw2 = jnp.dot(h.astype(jnp.bfloat16), w2.astype(jnp.bfloat16),
                      preferred_element_type=jnp.float32)
        return jnp.maximum(jnp.dot(ab, hw2.astype(jnp.bfloat16),
                                   preferred_element_type=jnp.float32), 0.0)

    expected = jax.block_until_ready(ref(a_hat, x, w1, w2))
    assert out.shape == (MAX_LENGTH, nout)
    np.testing.assert_allclose(np.asarray(out), np.asarray(expected),
                               rtol=5e-2, atol=5e-2)

    print("KERNEL_OK")
</pallas_src>

<mosaic_0001>
module attributes {stable_mosaic.version = 11 : i64} {
  func.func @_gcn2_kernel(%arg0: i32, %arg1: memref<128x128xbf16, #tpu.memory_space<vmem>>, %arg2: memref<128x128xbf16, #tpu.memory_space<vmem>>, %arg3: memref<128x128xbf16, #tpu.memory_space<vmem>>, %arg4: memref<128x128xbf16, #tpu.memory_space<vmem>>, %arg5: memref<128x128xf32, #tpu.memory_space<vmem>>) attributes {dimension_semantics = [#tpu.dimension_semantics<arbitrary>], iteration_bounds = array<i64: 1>, scalar_prefetch = 0 : i64, scratch_operands = 0 : i64, tpu.core_type = #tpu.core_type<tc>, window_params = [{pipeline_mode = #tpu.pipeline_mode<synchronous>, transform_indices = @transform_0, window_bounds = array<i64: 128, 128>}, {pipeline_mode = #tpu.pipeline_mode<synchronous>, transform_indices = @transform_1, window_bounds = array<i64: 128, 128>}, {pipeline_mode = #tpu.pipeline_mode<synchronous>, transform_indices = @transform_2, window_bounds = array<i64: 128, 128>}, {pipeline_mode = #tpu.pipeline_mode<synchronous>, transform_indices = @transform_3, window_bounds = array<i64: 128, 128>}, {pipeline_mode = #tpu.pipeline_mode<synchronous>, transform_indices = @transform_4, window_bounds = array<i64: 128, 128>}]} {
    %c0 = arith.constant 0 : index
    %c0_0 = arith.constant 0 : index
    %0 = vector.load %arg1[%c0, %c0_0] : memref<128x128xbf16, #tpu.memory_space<vmem>>, vector<128x128xbf16>
    %c0_1 = arith.constant 0 : index
    %c0_2 = arith.constant 0 : index
    %1 = vector.load %arg2[%c0_1, %c0_2] : memref<128x128xbf16, #tpu.memory_space<vmem>>, vector<128x128xbf16>
    %c0_3 = arith.constant 0 : index
    %c0_4 = arith.constant 0 : index
    %2 = vector.load %arg3[%c0_3, %c0_4] : memref<128x128xbf16, #tpu.memory_space<vmem>>, vector<128x128xbf16>
    %c0_5 = arith.constant 0 : index
    %c0_6 = arith.constant 0 : index
    %3 = vector.load %arg4[%c0_5, %c0_6] : memref<128x128xbf16, #tpu.memory_space<vmem>>, vector<128x128xbf16>
    %cst = arith.constant dense<0.000000e+00> : vector<128x128xf32>
    %4 = tpu.matmul %1, %2, %cst {dimension_numbers = #tpu.dot_dimension_numbers<[1], [0], [0], [1], [0, 0, 1, 1], [], []>} : vector<128x128xbf16>, vector<128x128xbf16>, vector<128x128xf32> -> vector<128x128xf32>
    %5 = arith.truncf %4 : vector<128x128xf32> to vector<128x128xbf16>
    %cst_7 = arith.constant dense<0.000000e+00> : vector<128x128xf32>
    %6 = tpu.matmul %0, %5, %cst_7 {dimension_numbers = #tpu.dot_dimension_numbers<[1], [0], [0], [1], [0, 0, 1, 1], [], []>} : vector<128x128xbf16>, vector<128x128xbf16>, vector<128x128xf32> -> vector<128x128xf32>
    %cst_8 = arith.constant 0.000000e+00 : f32
    %7 = vector.broadcast %cst_8 : f32 to vector<128x128xf32>
    %8 = arith.maximumf %6, %7 : vector<128x128xf32>
    %9 = arith.truncf %8 : vector<128x128xf32> to vector<128x128xbf16>
    %cst_9 = arith.constant dense<0.000000e+00> : vector<128x128xf32>
    %10 = tpu.matmul %9, %3, %cst_9 {dimension_numbers = #tpu.dot_dimension_numbers<[1], [0], [0], [1], [0, 0, 1, 1], [], []>} : vector<128x128xbf16>, vector<128x128xbf16>, vector<128x128xf32> -> vector<128x128xf32>
    %11 = arith.truncf %10 : vector<128x128xf32> to vector<128x128xbf16>
    %cst_10 = arith.constant dense<0.000000e+00> : vector<128x128xf32>
    %12 = tpu.matmul %0, %11, %cst_10 {dimension_numbers = #tpu.dot_dimension_numbers<[1], [0], [0], [1], [0, 0, 1, 1], [], []>} : vector<128x128xbf16>, vector<128x128xbf16>, vector<128x128xf32> -> vector<128x128xf32>
    %cst_11 = arith.constant 0.000000e+00 : f32
    %13 = vector.broadcast %cst_11 : f32 to vector<128x128xf32>
    %14 = arith.maximumf %12, %13 : vector<128x128xf32>
    %c0_12 = arith.constant 0 : index
    %c0_13 = arith.constant 0 : index
    %15 = vector.load %arg5[%c0_12, %c0_13] : memref<128x128xf32, #tpu.memory_space<vmem>>, vector<128x128xf32>
    tpu.vector_store %arg5[%c0_12, %c0_13], %14 {strides = array<i32>} : memref<128x128xf32, #tpu.memory_space<vmem>>, vector<128x128xf32>,
    return
  }
  func.func @transform_0(%arg0: i32) -> (i32, i32) {
    %c0_i32 = arith.constant 0 : i32
    %c0_i32_0 = arith.constant 0 : i32
    %c0_i32_1 = arith.constant 0 : i32
    return %c0_i32, %c0_i32_0 : i32, i32
  }
  func.func @transform_1(%arg0: i32) -> (i32, i32) {
    %c0_i32 = arith.constant 0 : i32
    %c0_i32_0 = arith.constant 0 : i32
    %c0_i32_1 = arith.constant 0 : i32
    return %c0_i32, %c0_i32_0 : i32, i32
  }
  func.func @transform_2(%arg0: i32) -> (i32, i32) {
    %c0_i32 = arith.constant 0 : i32
    %c0_i32_0 = arith.constant 0 : i32
    %c0_i32_1 = arith.constant 0 : i32
    return %c0_i32, %c0_i32_0 : i32, i32
  }
  func.func @transform_3(%arg0: i32) -> (i32, i32) {
    %c0_i32 = arith.constant 0 : i32
    %c0_i32_0 = arith.constant 0 : i32
    %c0_i32_1 = arith.constant 0 : i32
    return %c0_i32, %c0_i32_0 : i32, i32
  }
  func.func @transform_4(%arg0: i32) -> (i32, i32) {
    %c0_i32 = arith.constant 0 : i32
    %c0_i32_0 = arith.constant 0 : i32
    %c0_i32_1 = arith.constant 0 : i32
    return %c0_i32, %c0_i32_0 : i32, i32
  }
}

</mosaic_0001>

<llo_original>
// kernel: gcn2_forward.1
$region0: #{gcn2_forward.1}
  #allocation0 [shape = 'u32[]', space=smem, size = 0x4, offset = 0x4, fixed_abs, tag = 'smem constant byte address 0x4 - core index']
  #allocation1 [shape = 'u32[144,128]{1,0:T(1,128)}', space=vmem, size = 0x12000, scoped, tag = 'internal scratch']
  %s0 = inlined_call_operand.vmem [shape: bf16[128,128], index: 0, kind: input, shape index: {}]
  %s1 = inlined_call_operand.vmem [shape: bf16[128,128], index: 1, kind: input, shape index: {}]
  %s2 = inlined_call_operand.vmem [shape: bf16[128,128], index: 2, kind: input, shape index: {}]
  %s3 = inlined_call_operand.vmem [shape: bf16[128,128], index: 3, kind: input, shape index: {}]
  %s4 = inlined_call_operand.vmem [shape: f32[128,128], index: 4, kind: output, shape index: {}]
  %s5 = sld [smem:[#allocation0]]
  $region26: #{gcn2_forward.1} parent=0
    _
  %s7 = ssub.s32 1, %s5
  %s8 = scalar_select 0, %s7, %s5
  // Predicated region
  $region2: #{gcn2_forward.1} parent=0 // pred_check
    _
  $region3: #{gcn2_forward.1} parent=0 // pred_check_branch
    %10 = sbr.rel (0) target = $region5
  $region4: #{gcn2_forward.1} parent=0 // pred_region
    _
  $region5: #{gcn2_forward.1} parent=0 // pred_fallthru
    _
  // Predicated region
  $region6: #{gcn2_forward.1} parent=0 // pred_check
    _
  $region7: #{gcn2_forward.1} parent=0 // pred_check_branch
    %12 = sbr.rel (0) target = $region9
  $region8: #{gcn2_forward.1} parent=0 // pred_region
    _
  $region9: #{gcn2_forward.1} parent=0 // pred_fallthru
    _
  // Predicated region
  $region10: #{gcn2_forward.1} parent=0 // pred_check
    _
  $region11: #{gcn2_forward.1} parent=0 // pred_check_branch
    %14 = sbr.rel (0) target = $region13
  $region12: #{gcn2_forward.1} parent=0 // pred_region
    _
  $region13: #{gcn2_forward.1} parent=0 // pred_fallthru
    _
  // Predicated region
  $region14: #{gcn2_forward.1} parent=0 // pred_check
    _
  $region15: #{gcn2_forward.1} parent=0 // pred_check_branch
    %16 = sbr.rel (0) target = $region17
  $region16: #{gcn2_forward.1} parent=0 // pred_region
    _
  $region17: #{gcn2_forward.1} parent=0 // pred_fallthru
    _
  %v18 = vld [vmem:[%s0] sm:$0xf]
  %v19 = vld [vmem:[%s0 + $0x4] sm:$0xf]
  %v20 = vld [vmem:[%s0 + $0x8] sm:$0xf]
  %v21 = vld [vmem:[%s0 + $0xc] sm:$0xf]
  %v22 = vld [vmem:[%s0 + $0x10] sm:$0xf]
  %v23 = vld [vmem:[%s0 + $0x14] sm:$0xf]
  %v24 = vld [vmem:[%s0 + $0x18] sm:$0xf]
  %v25 = vld [vmem:[%s0 + $0x1c] sm:$0xf]
  %v26 = vld [vmem:[%s0 + $0x20] sm:$0xf]
  %v27 = vld [vmem:[%s0 + $0x24] sm:$0xf]
  %v28 = vld [vmem:[%s0 + $0x28] sm:$0xf]
  %v29 = vld [vmem:[%s0 + $0x2c] sm:$0xf]
  %v30 = vld [vmem:[%s0 + $0x30] sm:$0xf]
  %v31 = vld [vmem:[%s0 + $0x34] sm:$0xf]
  %v32 = vld [vmem:[%s0 + $0x38] sm:$0xf]
  %v33 = vld [vmem:[%s0 + $0x3c] sm:$0xf]
  %v34 = vld [vmem:[%s1] sm:$0xf]
  %v35 = vld [vmem:[%s1 + $0x4] sm:$0xf]
  %v36 = vld [vmem:[%s1 + $0x8] sm:$0xf]
  %v37 = vld [vmem:[%s1 + $0xc] sm:$0xf]
  %v38 = vld [vmem:[%s1 + $0x10] sm:$0xf]
  %v39 = vld [vmem:[%s1 + $0x14] sm:$0xf]
  %v40 = vld [vmem:[%s1 + $0x18] sm:$0xf]
  %v41 = vld [vmem:[%s1 + $0x1c] sm:$0xf]
  %v42 = vld [vmem:[%s1 + $0x20] sm:$0xf]
  %v43 = vld [vmem:[%s1 + $0x24] sm:$0xf]
  %v44 = vld [vmem:[%s1 + $0x28] sm:$0xf]
  %v45 = vld [vmem:[%s1 + $0x2c] sm:$0xf]
  %v46 = vld [vmem:[%s1 + $0x30] sm:$0xf]
  %v47 = vld [vmem:[%s1 + $0x34] sm:$0xf]
  %v48 = vld [vmem:[%s1 + $0x38] sm:$0xf]
  %v49 = vld [vmem:[%s1 + $0x3c] sm:$0xf]
  %v50 = vld [vmem:[%s2] sm:$0xf]
  %v51 = vld [vmem:[%s2 + $0x4] sm:$0xf]
  %v52 = vld [vmem:[%s2 + $0x8] sm:$0xf]
  %v53 = vld [vmem:[%s2 + $0xc] sm:$0xf]
  %v54 = vld [vmem:[%s2 + $0x10] sm:$0xf]
  %v55 = vld [vmem:[%s2 + $0x14] sm:$0xf]
  %v56 = vld [vmem:[%s2 + $0x18] sm:$0xf]
  %v57 = vld [vmem:[%s2 + $0x1c] sm:$0xf]
  %v58 = vld [vmem:[%s2 + $0x20] sm:$0xf]
  %v59 = vld [vmem:[%s2 + $0x24] sm:$0xf]
  %v60 = vld [vmem:[%s2 + $0x28] sm:$0xf]
  %v61 = vld [vmem:[%s2 + $0x2c] sm:$0xf]
  %v62 = vld [vmem:[%s2 + $0x30] sm:$0xf]
  %v63 = vld [vmem:[%s2 + $0x34] sm:$0xf]
  %v64 = vld [vmem:[%s2 + $0x38] sm:$0xf]
  %v65 = vld [vmem:[%s2 + $0x3c] sm:$0xf]
  %v66 = vld [vmem:[%s3] sm:$0xf]
  %v67 = vld [vmem:[%s3 + $0x4] sm:$0xf]
  %v68 = vld [vmem:[%s3 + $0x8] sm:$0xf]
  %v69 = vld [vmem:[%s3 + $0xc] sm:$0xf]
  %v70 = vld [vmem:[%s3 + $0x10] sm:$0xf]
  %v71 = vld [vmem:[%s3 + $0x14] sm:$0xf]
  %v72 = vld [vmem:[%s3 + $0x18] sm:$0xf]
  %v73 = vld [vmem:[%s3 + $0x1c] sm:$0xf]
  %v74 = vld [vmem:[%s3 + $0x20] sm:$0xf]
  %v75 = vld [vmem:[%s3 + $0x24] sm:$0xf]
  %v76 = vld [vmem:[%s3 + $0x28] sm:$0xf]
  %v77 = vld [vmem:[%s3 + $0x2c] sm:$0xf]
  %v78 = vld [vmem:[%s3 + $0x30] sm:$0xf]
  %v79 = vld [vmem:[%s3 + $0x34] sm:$0xf]
  %v80 = vld [vmem:[%s3 + $0x38] sm:$0xf]
  %v81 = vld [vmem:[%s3 + $0x3c] sm:$0xf]
  %v98 = vunpack.c.l.b16 %v34
  %v99 = vunpack.c.l.b16 %v35
  %v100 = vunpack.c.l.b16 %v36
  %v101 = vunpack.c.l.b16 %v37
  %v102 = vunpack.c.l.b16 %v38
  %v103 = vunpack.c.l.b16 %v39
  %v104 = vunpack.c.l.b16 %v40
  %v105 = vunpack.c.l.b16 %v41
  %v106 = vunpack.c.l.b16 %v42
  %v107 = vunpack.c.l.b16 %v43
  %v108 = vunpack.c.l.b16 %v44
  %v109 = vunpack.c.l.b16 %v45
  %v110 = vunpack.c.l.b16 %v46
  %v111 = vunpack.c.l.b16 %v47
  %v112 = vunpack.c.l.b16 %v48
  %v113 = vunpack.c.l.b16 %v49
  %v114 = vpack.c.b16 %v99, %v98
  %v115 = vpack.c.b16 %v101, %v100
  %v116 = vpack.c.b16 %v103, %v102
  %v117 = vpack.c.b16 %v105, %v104
  %v118 = vpack.c.b16 %v107, %v106
  %v119 = vpack.c.b16 %v109, %v108
  %v120 = vpack.c.b16 %v111, %v110
  %v121 = vpack.c.b16 %v113, %v112
  %v146 = vunpack.c.l.b16 %v50
  %v147 = vunpack.c.l.b16 %v51
  %v148 = vunpack.c.l.b16 %v52
  %v149 = vunpack.c.l.b16 %v53
  %v150 = vunpack.c.l.b16 %v54
  %v151 = vunpack.c.l.b16 %v55
  %v152 = vunpack.c.l.b16 %v56
  %v153 = vunpack.c.l.b16 %v57
  %v154 = vunpack.c.l.b16 %v58
  %v155 = vunpack.c.l.b16 %v59
  %v156 = vunpack.c.l.b16 %v60
  %v157 = vunpack.c.l.b16 %v61
  %v158 = vunpack.c.l.b16 %v62
  %v159 = vunpack.c.l.b16 %v63
  %v160 = vunpack.c.l.b16 %v64
  %v161 = vunpack.c.l.b16 %v65
  %v162 = vpack.c.b16 %v147, %v146
  %v163 = vpack.c.b16 %v149, %v148
  %v164 = vpack.c.b16 %v151, %v150
  %v165 = vpack.c.b16 %v153, %v152
  %v166 = vpack.c.b16 %v155, %v154
  %v167 = vpack.c.b16 %v157, %v156
  %v168 = vpack.c.b16 %v159, %v158
  %v169 = vpack.c.b16 %v161, %v160
  %178 = vmatprep.subr.bf16.mxu0 0
  %179 = vmatpush1.bf16.msra.mxu0 %v169
  %180 = vmatprep.subr.bf16.mxu0 0
  %181 = vmatpush1.bf16.msra.mxu0 %v168
  %182 = vmatprep.subr.bf16.mxu0 0
  %183 = vmatpush1.bf16.msra.mxu0 %v167
  %184 = vmatprep.subr.bf16.mxu0 0
  %185 = vmatpush1.bf16.msra.mxu0 %v166
  %186 = vmatprep.subr.bf16.mxu0 0
  %187 = vmatpush1.bf16.msra.mxu0 %v165
  %188 = vmatprep.subr.bf16.mxu0 0
  %189 = vmatpush1.bf16.msra.mxu0 %v164
  %190 = vmatprep.subr.bf16.mxu0 0
  %191 = vmatpush1.bf16.msra.mxu0 %v163
  %192 = vmatprep.subr.bf16.mxu0 0
  %193 = vmatpush1.bf16.msra.mxu0 %v162
  %194 = vmatprep.subr.bf16.mxu0 0
  %195 = vmatpush2.bf16.msra.mxu0 0
  %196 = vmatprep.subr.bf16.mxu0 0
  %197 = vmatpush2.bf16.msra.mxu0 0
  %198 = vmatprep.subr.bf16.mxu0 0
  %199 = vmatpush2.bf16.msra.mxu0 0
  %200 = vmatprep.subr.bf16.mxu0 0
  %201 = vmatpush2.bf16.msra.mxu0 0
  %202 = vmatprep.subr.bf16.mxu0 0
  %203 = vmatpush2.bf16.msra.mxu0 0
  %204 = vmatprep.subr.bf16.mxu0 0
  %205 = vmatpush2.bf16.msra.mxu0 0
  %206 = vmatprep.subr.bf16.mxu0 0
  %207 = vmatpush2.bf16.msra.mxu0 0
  %208 = vmatprep.subr.bf16.mxu0 0
  %209 = vmatpush2.bf16.msra.mxu0 0
  %210 = vmatprep.mubr.bf16.mxu0 0
  %211 = vmatmul.mubr.bf16.gmra.mxu0 %v114
  %v212 = vpop.f32.mrf.mxu0
  %v213 = vadd.f32 0.0, %v212
  %v214 = vpop.f32.mrf.mxu0
  %v215 = vpop.f32.mrf.mxu0
  %v216 = vadd.f32 0.0, %v215
  %v217 = vpop.f32.mrf.mxu0
  %218 = vmatprep.mubr.bf16.mxu0 0
  %219 = vmatmul.mubr.bf16.gmra.mxu0 %v115
  %v220 = vpop.f32.mrf.mxu0
  %v221 = vadd.f32 0.0, %v220
  %v222 = vpop.f32.mrf.mxu0
  %v223 = vpop.f32.mrf.mxu0
  %v224 = vadd.f32 0.0, %v223
  %v225 = vpop.f32.mrf.mxu0
  %226 = vmatprep.mubr.bf16.mxu0 0
  %227 = vmatmul.mubr.bf16.gmra.mxu0 %v116
  %v228 = vpop.f32.mrf.mxu0
  %v229 = vadd.f32 0.0, %v228
  %v230 = vpop.f32.mrf.mxu0
  %v231 = vpop.f32.mrf.mxu0
  %v232 = vadd.f32 0.0, %v231
  %v233 = vpop.f32.mrf.mxu0
  %234 = vmatprep.mubr.bf16.mxu0 0
  %235 = vmatmul.mubr.bf16.gmra.mxu0 %v117
  %v236 = vpop.f32.mrf.mxu0
  %v237 = vadd.f32 0.0, %v236
  %v238 = vpop.f32.mrf.mxu0
  %v239 = vpop.f32.mrf.mxu0
  %v240 = vadd.f32 0.0, %v239
  %v241 = vpop.f32.mrf.mxu0
  %242 = vmatprep.mubr.bf16.mxu0 0
  %243 = vmatmul.mubr.bf16.gmra.mxu0 %v118
  %v244 = vpop.f32.mrf.mxu0
  %v245 = vadd.f32 0.0, %v244
  %v246 = vpop.f32.mrf.mxu0
  %v247 = vpop.f32.mrf.mxu0
  %v248 = vadd.f32 0.0, %v247
  %v249 = vpop.f32.mrf.mxu0
  %250 = vmatprep.mubr.bf16.mxu0 0
  %251 = vmatmul.mubr.bf16.gmra.mxu0 %v119
  %v252 = vpop.f32.mrf.mxu0
  %v253 = vadd.f32 0.0, %v252
  %v254 = vpop.f32.mrf.mxu0
  %v255 = vpop.f32.mrf.mxu0
  %v256 = vadd.f32 0.0, %v255
  %v257 = vpop.f32.mrf.mxu0
  %258 = vmatprep.mubr.bf16.mxu0 0
  %259 = vmatmul.mubr.bf16.gmra.mxu0 %v120
  %v260 = vpop.f32.mrf.mxu0
  %v261 = vadd.f32 0.0, %v260
  %v262 = vpop.f32.mrf.mxu0
  %v263 = vpop.f32.mrf.mxu0
  %v264 = vadd.f32 0.0, %v263
  %v265 = vpop.f32.mrf.mxu0
  %266 = vmatprep.mubr.bf16.mxu0 0
  %267 = vmatmul.mubr.bf16.gmra.mxu0 %v121
  %v268 = vpop.f32.mrf.mxu0
  %v269 = vadd.f32 0.0, %v268
  %v270 = vpop.f32.mrf.mxu0
  %v271 = vpop.f32.mrf.mxu0
  %v272 = vadd.f32 0.0, %v271
  %v273 = vpop.f32.mrf.mxu0
  %274 = vdwg.mxu0
  %v275 = vpack.c.bf16 %v216, %v213
  %v276 = vpack.c.bf16 %v224, %v221
  %v277 = vpack.c.bf16 %v232, %v229
  %v278 = vpack.c.bf16 %v240, %v237
  %v279 = vpack.c.bf16 %v248, %v245
  %v280 = vpack.c.bf16 %v256, %v253
  %v281 = vpack.c.bf16 %v264, %v261
  %v282 = vpack.c.bf16 %v272, %v269
  %v299 = vunpack.c.l.b16 %v18
  %v300 = vunpack.c.l.b16 %v19
  %v301 = vunpack.c.l.b16 %v20
  %v302 = vunpack.c.l.b16 %v21
  %v303 = vunpack.c.l.b16 %v22
  %v304 = vunpack.c.l.b16 %v23
  %v305 = vunpack.c.l.b16 %v24
  %v306 = vunpack.c.l.b16 %v25
  %v307 = vunpack.c.l.b16 %v26
  %v308 = vunpack.c.l.b16 %v27
  %v309 = vunpack.c.l.b16 %v28
  %v310 = vunpack.c.l.b16 %v29
  %v311 = vunpack.c.l.b16 %v30
  %v312 = vunpack.c.l.b16 %v31
  %v313 = vunpack.c.l.b16 %v32
  %v314 = vunpack.c.l.b16 %v33
  %v315 = vpack.c.b16 %v300, %v299
  %v316 = vpack.c.b16 %v302, %v301
  %v317 = vpack.c.b16 %v304, %v303
  %v318 = vpack.c.b16 %v306, %v305
  %v319 = vpack.c.b16 %v308, %v307
  %v320 = vpack.c.b16 %v310, %v309
  %v321 = vpack.c.b16 %v312, %v311
  %v322 = vpack.c.b16 %v314, %v313
  %331 = vmatprep.subr.bf16.mxu0 0
  %332 = vmatpush1.bf16.msra.mxu0 %v282
  %333 = vmatprep.subr.bf16.mxu0 0
  %334 = vmatpush1.bf16.msra.mxu0 %v281
  %335 = vmatprep.subr.bf16.mxu0 0
  %336 = vmatpush1.bf16.msra.mxu0 %v280
  %337 = vmatprep.subr.bf16.mxu0 0
  %338 = vmatpush1.bf16.msra.mxu0 %v279
  %339 = vmatprep.subr.bf16.mxu0 0
  %340 = vmatpush1.bf16.msra.mxu0 %v278
  %341 = vmatprep.subr.bf16.mxu0 0
  %342 = vmatpush1.bf16.msra.mxu0 %v277
  %343 = vmatprep.subr.bf16.mxu0 0
  %344 = vmatpush1.bf16.msra.mxu0 %v276
  %345 = vmatprep.subr.bf16.mxu0 0
  %346 = vmatpush1.bf16.msra.mxu0 %v275
  %347 = vmatprep.subr.bf16.mxu0 0
  %348 = vmatpush2.bf16.msra.mxu0 0
  %349 = vmatprep.subr.bf16.mxu0 0
  %350 = vmatpush2.bf16.msra.mxu0 0
  %351 = vmatprep.subr.bf16.mxu0 0
  %352 = vmatpush2.bf16.msra.mxu0 0
  %353 = vmatprep.subr.bf16.mxu0 0
  %354 = vmatpush2.bf16.msra.mxu0 0
  %355 = vmatprep.subr.bf16.mxu0 0
  %356 = vmatpush2.bf16.msra.mxu0 0
  %357 = vmatprep.subr.bf16.mxu0 0
  %358 = vmatpush2.bf16.msra.mxu0 0
  %359 = vmatprep.subr.bf16.mxu0 0
  %360 = vmatpush2.bf16.msra.mxu0 0
  %361 = vmatprep.subr.bf16.mxu0 0
  %362 = vmatpush2.bf16.msra.mxu0 0
  %363 = vmatprep.mubr.bf16.mxu0 0
  %364 = vmatmul.mubr.bf16.gmra.mxu0 %v315
  %v365 = vpop.f32.mrf.mxu0
  %v366 = vadd.f32 0.0, %v365
  %v367 = vpop.f32.mrf.mxu0
  %v368 = vpop.f32.mrf.mxu0
  %v369 = vadd.f32 0.0, %v368
  %v370 = vpop.f32.mrf.mxu0
  %371 = vmatprep.mubr.bf16.mxu0 0
  %372 = vmatmul.mubr.bf16.gmra.mxu0 %v316
  %v373 = vpop.f32.mrf.mxu0
  %v374 = vadd.f32 0.0, %v373
  %v375 = vpop.f32.mrf.mxu0
  %v376 = vpop.f32.mrf.mxu0
  %v377 = vadd.f32 0.0, %v376
  %v378 = vpop.f32.mrf.mxu0
  %379 = vmatprep.mubr.bf16.mxu0 0
  %380 = vmatmul.mubr.bf16.gmra.mxu0 %v317
  %v381 = vpop.f32.mrf.mxu0
  %v382 = vadd.f32 0.0, %v381
  %v383 = vpop.f32.mrf.mxu0
  %v384 = vpop.f32.mrf.mxu0
  %v385 = vadd.f32 0.0, %v384
  %v386 = vpop.f32.mrf.mxu0
  %387 = vmatprep.mubr.bf16.mxu0 0
  %388 = vmatmul.mubr.bf16.gmra.mxu0 %v318
  %v389 = vpop.f32.mrf.mxu0
  %v390 = vadd.f32 0.0, %v389
  %v391 = vpop.f32.mrf.mxu0
  %v392 = vpop.f32.mrf.mxu0
  %v393 = vadd.f32 0.0, %v392
  %v394 = vpop.f32.mrf.mxu0
  %395 = vmatprep.mubr.bf16.mxu0 0
  %396 = vmatmul.mubr.bf16.gmra.mxu0 %v319
  %v397 = vpop.f32.mrf.mxu0
  %v398 = vadd.f32 0.0, %v397
  %v399 = vpop.f32.mrf.mxu0
  %v400 = vpop.f32.mrf.mxu0
  %v401 = vadd.f32 0.0, %v400
  %v402 = vpop.f32.mrf.mxu0
  %403 = vmatprep.mubr.bf16.mxu0 0
  %404 = vmatmul.mubr.bf16.gmra.mxu0 %v320
  %v405 = vpop.f32.mrf.mxu0
  %v406 = vadd.f32 0.0, %v405
  %v407 = vpop.f32.mrf.mxu0
  %v408 = vpop.f32.mrf.mxu0
  %v409 = vadd.f32 0.0, %v408
  %v410 = vpop.f32.mrf.mxu0
  %411 = vmatprep.mubr.bf16.mxu0 0
  %412 = vmatmul.mubr.bf16.gmra.mxu0 %v321
  %v413 = vpop.f32.mrf.mxu0
  %v414 = vadd.f32 0.0, %v413
  %v415 = vpop.f32.mrf.mxu0
  %v416 = vpop.f32.mrf.mxu0
  %v417 = vadd.f32 0.0, %v416
  %v418 = vpop.f32.mrf.mxu0
  %419 = vmatprep.mubr.bf16.mxu0 0
  %420 = vmatmul.mubr.bf16.gmra.mxu0 %v322
  %v421 = vpop.f32.mrf.mxu0
  %v422 = vadd.f32 0.0, %v421
  %v423 = vpop.f32.mrf.mxu0
  %v424 = vpop.f32.mrf.mxu0
  %v425 = vadd.f32 0.0, %v424
  %v426 = vpop.f32.mrf.mxu0
  %427 = vdwg.mxu0
  %v428 = vmax.f32 %v366, 0.0
  %v429 = vmax.f32 %v369, 0.0
  %v430 = vmax.f32 %v374, 0.0
  %v431 = vmax.f32 %v377, 0.0
  %v432 = vmax.f32 %v382, 0.0
  %v433 = vmax.f32 %v385, 0.0
  %v434 = vmax.f32 %v390, 0.0
  %v435 = vmax.f32 %v393, 0.0
  %v436 = vmax.f32 %v398, 0.0
  %v437 = vmax.f32 %v401, 0.0
  %v438 = vmax.f32 %v406, 0.0
  %v439 = vmax.f32 %v409, 0.0
  %v440 = vmax.f32 %v414, 0.0
  %v441 = vmax.f32 %v417, 0.0
  %v442 = vmax.f32 %v422, 0.0
  %v443 = vmax.f32 %v425, 0.0
  %v444 = vpack.c.bf16 %v429, %v428
  %v445 = vpack.c.bf16 %v431, %v430
  %v446 = vpack.c.bf16 %v433, %v432
  %v447 = vpack.c.bf16 %v435, %v434
  %v448 = vpack.c.bf16 %v437, %v436
  %v449 = vpack.c.bf16 %v439, %v438
  %v450 = vpack.c.bf16 %v441, %v440
  %v451 = vpack.c.bf16 %v443, %v442
  %v468 = vunpack.c.l.b16 %v66
  %v469 = vunpack.c.l.b16 %v67
  %v470 = vunpack.c.l.b16 %v68
  %v471 = vunpack.c.l.b16 %v69
  %v472 = vunpack.c.l.b16 %v70
  %v473 = vunpack.c.l.b16 %v71
  %v474 = vunpack.c.l.b16 %v72
  %v475 = vunpack.c.l.b16 %v73
  %v476 = vunpack.c.l.b16 %v74
  %v477 = vunpack.c.l.b16 %v75
  %v478 = vunpack.c.l.b16 %v76
  %v479 = vunpack.c.l.b16 %v77
  %v480 = vunpack.c.l.b16 %v78
  %v481 = vunpack.c.l.b16 %v79
  %v482 = vunpack.c.l.b16 %v80
  %v483 = vunpack.c.l.b16 %v81
  %v484 = vpack.c.b16 %v469, %v468
  %v485 = vpack.c.b16 %v471, %v470
  %v486 = vpack.c.b16 %v473, %v472
  %v487 = vpack.c.b16 %v475, %v474
  %v488 = vpack.c.b16 %v477, %v476
  %v489 = vpack.c.b16 %v479, %v478
  %v490 = vpack.c.b16 %v481, %v480
  %v491 = vpack.c.b16 %v483, %v482
  %500 = vmatprep.subr.bf16.mxu0 0
  %501 = vmatpush1.bf16.msra.mxu0 %v491
  %502 = vmatprep.subr.bf16.mxu0 0
  %503 = vmatpush1.bf16.msra.mxu0 %v490
  %504 = vmatprep.subr.bf16.mxu0 0
  %505 = vmatpush1.bf16.msra.mxu0 %v489
  %506 = vmatprep.subr.bf16.mxu0 0
  %507 = vmatpush1.bf16.msra.mxu0 %v488
  %508 = vmatprep.subr.bf16.mxu0 0
  %509 = vmatpush1.bf16.msra.mxu0 %v487
  %510 = vmatprep.subr.bf16.mxu0 0
  %511 = vmatpush1.bf16.msra.mxu0 %v486
  %512 = vmatprep.subr.bf16.mxu0 0
  %513 = vmatpush1.bf16.msra.mxu0 %v485
  %514 = vmatprep.subr.bf16.mxu0 0
  %515 = vmatpush1.bf16.msra.mxu0 %v484
  %516 = vmatprep.subr.bf16.mxu0 0
  %517 = vmatpush2.bf16.msra.mxu0 0
  %518 = vmatprep.subr.bf16.mxu0 0
  %519 = vmatpush2.bf16.msra.mxu0 0
  %520 = vmatprep.subr.bf16.mxu0 0
  %521 = vmatpush2.bf16.msra.mxu0 0
  %522 = vmatprep.subr.bf16.mxu0 0
  %523 = vmatpush2.bf16.msra.mxu0 0
  %524 = vmatprep.subr.bf16.mxu0 0
  %525 = vmatpush2.bf16.msra.mxu0 0
  %526 = vmatprep.subr.bf16.mxu0 0
  %527 = vmatpush2.bf16.msra.mxu0 0
  %528 = vmatprep.subr.bf16.mxu0 0
  %529 = vmatpush2.bf16.msra.mxu0 0
  %530 = vmatprep.subr.bf16.mxu0 0
  %531 = vmatpush2.bf16.msra.mxu0 0
  %532 = vmatprep.mubr.bf16.mxu0 0
  %533 = vmatmul.mubr.bf16.gmra.mxu0 %v444
  %v534 = vpop.f32.mrf.mxu0
  %v535 = vadd.f32 0.0, %v534
  %v536 = vpop.f32.mrf.mxu0
  %v537 = vpop.f32.mrf.mxu0
  %v538 = vadd.f32 0.0, %v537
  %v539 = vpop.f32.mrf.mxu0
  %540 = vmatprep.mubr.bf16.mxu0 0
  %541 = vmatmul.mubr.bf16.gmra.mxu0 %v445
  %v542 = vpop.f32.mrf.mxu0
  %v543 = vadd.f32 0.0, %v542
  %v544 = vpop.f32.mrf.mxu0
  %v545 = vpop.f32.mrf.mxu0
  %v546 = vadd.f32 0.0, %v545
  %v547 = vpop.f32.mrf.mxu0
  %548 = vmatprep.mubr.bf16.mxu0 0
  %549 = vmatmul.mubr.bf16.gmra.mxu0 %v446
  %v550 = vpop.f32.mrf.mxu0
  %v551 = vadd.f32 0.0, %v550
  %v552 = vpop.f32.mrf.mxu0
  %v553 = vpop.f32.mrf.mxu0
  %v554 = vadd.f32 0.0, %v553
  %v555 = vpop.f32.mrf.mxu0
  %556 = vmatprep.mubr.bf16.mxu0 0
  %557 = vmatmul.mubr.bf16.gmra.mxu0 %v447
  %v558 = vpop.f32.mrf.mxu0
  %v559 = vadd.f32 0.0, %v558
  %v560 = vpop.f32.mrf.mxu0
  %v561 = vpop.f32.mrf.mxu0
  %v562 = vadd.f32 0.0, %v561
  %v563 = vpop.f32.mrf.mxu0
  %564 = vmatprep.mubr.bf16.mxu0 0
  %565 = vmatmul.mubr.bf16.gmra.mxu0 %v448
  %v566 = vpop.f32.mrf.mxu0
  %v567 = vadd.f32 0.0, %v566
  %v568 = vpop.f32.mrf.mxu0
  %v569 = vpop.f32.mrf.mxu0
  %v570 = vadd.f32 0.0, %v569
  %v571 = vpop.f32.mrf.mxu0
  %572 = vmatprep.mubr.bf16.mxu0 0
  %573 = vmatmul.mubr.bf16.gmra.mxu0 %v449
  %v574 = vpop.f32.mrf.mxu0
  %v575 = vadd.f32 0.0, %v574
  %v576 = vpop.f32.mrf.mxu0
  %v577 = vpop.f32.mrf.mxu0
  %v578 = vadd.f32 0.0, %v577
  %v579 = vpop.f32.mrf.mxu0
  %580 = vmatprep.mubr.bf16.mxu0 0
  %581 = vmatmul.mubr.bf16.gmra.mxu0 %v450
  %v582 = vpop.f32.mrf.mxu0
  %v583 = vadd.f32 0.0, %v582
  %v584 = vpop.f32.mrf.mxu0
  %v585 = vpop.f32.mrf.mxu0
  %v586 = vadd.f32 0.0, %v585
  %v587 = vpop.f32.mrf.mxu0
  %588 = vmatprep.mubr.bf16.mxu0 0
  %589 = vmatmul.mubr.bf16.gmra.mxu0 %v451
  %v590 = vpop.f32.mrf.mxu0
  %v591 = vadd.f32 0.0, %v590
  %v592 = vpop.f32.mrf.mxu0
  %v593 = vpop.f32.mrf.mxu0
  %v594 = vadd.f32 0.0, %v593
  %v595 = vpop.f32.mrf.mxu0
  %596 = vdwg.mxu0
  %v597 = vpack.c.bf16 %v538, %v535
  %v598 = vpack.c.bf16 %v546, %v543
  %v599 = vpack.c.bf16 %v554, %v551
  %v600 = vpack.c.bf16 %v562, %v559
  %v601 = vpack.c.bf16 %v570, %v567
  %v602 = vpack.c.bf16 %v578, %v575
  %v603 = vpack.c.bf16 %v586, %v583
  %v604 = vpack.c.bf16 %v594, %v591
  %605 = vmatprep.subr.bf16.mxu0 0
  %606 = vmatpush1.bf16.msra.mxu0 %v604
  %607 = vmatprep.subr.bf16.mxu0 0
  %608 = vmatpush1.bf16.msra.mxu0 %v603
  %609 = vmatprep.subr.bf16.mxu0 0
  %610 = vmatpush1.bf16.msra.mxu0 %v602
  %611 = vmatprep.subr.bf16.mxu0 0
  %612 = vmatpush1.bf16.msra.mxu0 %v601
  %613 = vmatprep.subr.bf16.mxu0 0
  %614 = vmatpush1.bf16.msra.mxu0 %v600
  %615 = vmatprep.subr.bf16.mxu0 0
  %616 = vmatpush1.bf16.msra.mxu0 %v599
  %617 = vmatprep.subr.bf16.mxu0 0
  %618 = vmatpush1.bf16.msra.mxu0 %v598
  %619 = vmatprep.subr.bf16.mxu0 0
  %620 = vmatpush1.bf16.msra.mxu0 %v597
  %621 = vmatprep.subr.bf16.mxu0 0
  %622 = vmatpush2.bf16.msra.mxu0 0
  %623 = vmatprep.subr.bf16.mxu0 0
  %624 = vmatpush2.bf16.msra.mxu0 0
  %625 = vmatprep.subr.bf16.mxu0 0
  %626 = vmatpush2.bf16.msra.mxu0 0
  %627 = vmatprep.subr.bf16.mxu0 0
  %628 = vmatpush2.bf16.msra.mxu0 0
  %629 = vmatprep.subr.bf16.mxu0 0
  %630 = vmatpush2.bf16.msra.mxu0 0
  %631 = vmatprep.subr.bf16.mxu0 0
  %632 = vmatpush2.bf16.msra.mxu0 0
  %633 = vmatprep.subr.bf16.mxu0 0
  %634 = vmatpush2.bf16.msra.mxu0 0
  %635 = vmatprep.subr.bf16.mxu0 0
  %636 = vmatpush2.bf16.msra.mxu0 0
  %637 = vmatprep.mubr.bf16.mxu0 0
  %638 = vmatmul.mubr.bf16.gmra.mxu0 %v315
  %v639 = vpop.f32.mrf.mxu0
  %v640 = vadd.f32 0.0, %v639
  %v641 = vpop.f32.mrf.mxu0
  %v642 = vpop.f32.mrf.mxu0
  %v643 = vadd.f32 0.0, %v642
  %v644 = vpop.f32.mrf.mxu0
  %645 = vmatprep.mubr.bf16.mxu0 0
  %646 = vmatmul.mubr.bf16.gmra.mxu0 %v316
  %v647 = vpop.f32.mrf.mxu0
  %v648 = vadd.f32 0.0, %v647
  %v649 = vpop.f32.mrf.mxu0
  %v650 = vpop.f32.mrf.mxu0
  %v651 = vadd.f32 0.0, %v650
  %v652 = vpop.f32.mrf.mxu0
  %653 = vmatprep.mubr.bf16.mxu0 0
  %654 = vmatmul.mubr.bf16.gmra.mxu0 %v317
  %v655 = vpop.f32.mrf.mxu0
  %v656 = vadd.f32 0.0, %v655
  %v657 = vpop.f32.mrf.mxu0
  %v658 = vpop.f32.mrf.mxu0
  %v659 = vadd.f32 0.0, %v658
  %v660 = vpop.f32.mrf.mxu0
  %661 = vmatprep.mubr.bf16.mxu0 0
  %662 = vmatmul.mubr.bf16.gmra.mxu0 %v318
  %v663 = vpop.f32.mrf.mxu0
  %v664 = vadd.f32 0.0, %v663
  %v665 = vpop.f32.mrf.mxu0
  %v666 = vpop.f32.mrf.mxu0
  %v667 = vadd.f32 0.0, %v666
  %v668 = vpop.f32.mrf.mxu0
  %669 = vmatprep.mubr.bf16.mxu0 0
  %670 = vmatmul.mubr.bf16.gmra.mxu0 %v319
  %v671 = vpop.f32.mrf.mxu0
  %v672 = vadd.f32 0.0, %v671
  %v673 = vpop.f32.mrf.mxu0
  %v674 = vpop.f32.mrf.mxu0
  %v675 = vadd.f32 0.0, %v674
  %v676 = vpop.f32.mrf.mxu0
  %677 = vmatprep.mubr.bf16.mxu0 0
  %678 = vmatmul.mubr.bf16.gmra.mxu0 %v320
  %v679 = vpop.f32.mrf.mxu0
  %v680 = vadd.f32 0.0, %v679
  %v681 = vpop.f32.mrf.mxu0
  %v682 = vpop.f32.mrf.mxu0
  %v683 = vadd.f32 0.0, %v682
  %v684 = vpop.f32.mrf.mxu0
  %685 = vmatprep.mubr.bf16.mxu0 0
  %686 = vmatmul.mubr.bf16.gmra.mxu0 %v321
  %v687 = vpop.f32.mrf.mxu0
  %v688 = vadd.f32 0.0, %v687
  %v689 = vpop.f32.mrf.mxu0
  %v690 = vpop.f32.mrf.mxu0
  %v691 = vadd.f32 0.0, %v690
  %v692 = vpop.f32.mrf.mxu0
  %693 = vmatprep.mubr.bf16.mxu0 0
  %694 = vmatmul.mubr.bf16.gmra.mxu0 %v322
  %v695 = vpop.f32.mrf.mxu0
  %v696 = vadd.f32 0.0, %v695
  %v697 = vpop.f32.mrf.mxu0
  %v698 = vpop.f32.mrf.mxu0
  %v699 = vadd.f32 0.0, %v698
  %v700 = vpop.f32.mrf.mxu0
  %701 = vdwg.mxu0
  %v702 = vmax.f32 %v640, 0.0
  %v703 = vmax.f32 %v643, 0.0
  %v704 = vmax.f32 %v648, 0.0
  %v705 = vmax.f32 %v651, 0.0
  %v706 = vmax.f32 %v656, 0.0
  %v707 = vmax.f32 %v659, 0.0
  %v708 = vmax.f32 %v664, 0.0
  %v709 = vmax.f32 %v667, 0.0
  %v710 = vmax.f32 %v672, 0.0
  %v711 = vmax.f32 %v675, 0.0
  %v712 = vmax.f32 %v680, 0.0
  %v713 = vmax.f32 %v683, 0.0
  %v714 = vmax.f32 %v688, 0.0
  %v715 = vmax.f32 %v691, 0.0
  %v716 = vmax.f32 %v696, 0.0
  %v717 = vmax.f32 %v699, 0.0
  %718 = vst [vmem:[%s4] sm:$0xff] %v702
  %719 = vst [vmem:[%s4 + $0x8] sm:$0xff] %v703
  %720 = vst [vmem:[%s4 + $0x10] sm:$0xff] %v704
  %721 = vst [vmem:[%s4 + $0x18] sm:$0xff] %v705
  %722 = vst [vmem:[%s4 + $0x20] sm:$0xff] %v706
  %723 = vst [vmem:[%s4 + $0x28] sm:$0xff] %v707
  %724 = vst [vmem:[%s4 + $0x30] sm:$0xff] %v708
  %725 = vst [vmem:[%s4 + $0x38] sm:$0xff] %v709
  %726 = vst [vmem:[%s4 + $0x40] sm:$0xff] %v710
  %727 = vst [vmem:[%s4 + $0x48] sm:$0xff] %v711
  %728 = vst [vmem:[%s4 + $0x50] sm:$0xff] %v712
  %729 = vst [vmem:[%s4 + $0x58] sm:$0xff] %v713
  %730 = vst [vmem:[%s4 + $0x60] sm:$0xff] %v714
  %731 = vst [vmem:[%s4 + $0x68] sm:$0xff] %v715
  %732 = vst [vmem:[%s4 + $0x70] sm:$0xff] %v716
  %733 = vst [vmem:[%s4 + $0x78] sm:$0xff] %v717
  // Predicated region
  $region18: #{gcn2_forward.1} parent=0 // pred_check
    _
  $region19: #{gcn2_forward.1} parent=0 // pred_check_branch
    %735 = sbr.rel (0) target = $region21
  $region20: #{gcn2_forward.1} parent=0 // pred_region
    _
  $region21: #{gcn2_forward.1} parent=0 // pred_fallthru
    _
  // Predicated region
  $region22: #{gcn2_forward.1} parent=0 // pred_check
    _
  $region23: #{gcn2_forward.1} parent=0 // pred_check_branch
    %737 = sbr.rel (0) target = $region25
  $region24: #{gcn2_forward.1} parent=0 // pred_region
    _
  $region25: #{gcn2_forward.1} parent=0 // pred_fallthru
    _

</llo_original>
